<compile_context>
chip_gen: v6e
topology: v6e:2x2x1
jax: 0.10.0
libtpu: 0.0.40
codegen_flags: <defaults>
</compile_context>

<pallas_src>
import functools
import math

import jax
import jax.numpy as jnp
from jax import lax
from jax.experimental import pallas as pl
from jax.experimental.pallas import tpu as pltpu

_SMOOTH = 1.0
_GAMMA = 2          # FocalLoss gamma (hard-coded below as the squared terms)
_EPS = 1e-3         # FocalLoss eps
_LANES = 128
_MAX_TR = 2048      # rows per block: 2048 * 128 * 4B = 1 MiB per f32 input block


def _scst_stats_kernel(x_ref, t_ref, out_ref, acc_ref, *, n_valid, tr, needs_mask):
    """Grid (b, k): reduce one (1, tr, 128) tile of sample b into lane-dense
    accumulators; emit the per-sample (3, 128) partials on the last k."""
    k = pl.program_id(1)
    nk = pl.num_programs(1)

    @pl.when(k == 0)
    def _init():
        acc_ref[...] = jnp.zeros_like(acc_ref)

    x = x_ref[0].astype(jnp.float32)          # (tr, 128)
    t = t_ref[0].astype(jnp.float32)

    def _accumulate(xv, tv, valid):
        if valid is not None:
            zero = jnp.zeros_like(xv)
            # select (not multiply): guards against NaN/Inf garbage in the
            # unwritten tail of a partial last block.
            xv = jnp.where(valid, xv, zero)
            tv = jnp.where(valid, tv, zero)
        inter = xv * tv
        union = xv * xv + tv * tv
        # Focal loss (gamma=2): -(t*(1-x)^2*log(x) + (1-t)*x^2*log(1-x)), x clamped.
        xc = jnp.clip(xv, _EPS, 1.0 - _EPS)
        one_m = 1.0 - xc
        fl = -(tv * (one_m * one_m) * jnp.log(xc)
               + (1.0 - tv) * (xc * xc) * jnp.log(one_m))
        if valid is not None:
            # clamp makes padded (x=0,t=0) elements contribute a tiny nonzero
            # focal term, so mask the focal values explicitly as well.
            fl = jnp.where(valid, fl, jnp.zeros_like(fl))
        # Lane-dense partials: reduce only the sublane/row axis here; the
        # 128-lane reduce is deferred to the JAX wrapper (once per sample).
        acc_ref[0] += jnp.sum(inter, axis=0, keepdims=True)
        acc_ref[1] += jnp.sum(union, axis=0, keepdims=True)
        acc_ref[2] += jnp.sum(fl, axis=0, keepdims=True)

    if needs_mask:
        # Interior tiles run completely unmasked; only the last tile pays for
        # the iota/compare/select path.
        @pl.when(k == nk - 1)
        def _tail_tile():
            row = lax.broadcasted_iota(jnp.int32, (tr, _LANES), 0)
            col = lax.broadcasted_iota(jnp.int32, (tr, _LANES), 1)
            elem = (k * tr + row) * _LANES + col
            _accumulate(x, t, elem < n_valid)

        @pl.when(k != nk - 1)
        def _interior_tile():
            _accumulate(x, t, None)
    else:
        _accumulate(x, t, None)

    @pl.when(k == nk - 1)
    def _finalize():
        # One lane-dense (3, 128) output block per sample, written once.
        out_ref[0, 0:1, :] = acc_ref[0]
        out_ref[0, 1:2, :] = acc_ref[1]
        out_ref[0, 2:3, :] = acc_ref[2]


def _scst_stats(x, t):
    """Returns per-sample (intersect, union, focal_sum), each shape (B,), f32."""
    B = x.shape[0]
    N = int(math.prod(x.shape[1:]))
    x_flat = x.reshape(B, N)
    t_flat = t.reshape(B, N)

    n_rows = pl.cdiv(N, _LANES)
    if N != n_rows * _LANES:
        # Minimal lane-alignment pad (< 128 elements per sample) only when N is
        # not a multiple of 128; padded tail is masked out in-kernel anyway.
        pad = ((0, 0), (0, n_rows * _LANES - N))
        x_flat = jnp.pad(x_flat, pad)
        t_flat = jnp.pad(t_flat, pad)
    x3 = x_flat.reshape(B, n_rows, _LANES)
    t3 = t_flat.reshape(B, n_rows, _LANES)

    tr = min(_MAX_TR, ((n_rows + 7) // 8) * 8)          # multiple of 8 sublanes
    n_row_tiles = pl.cdiv(n_rows, tr)
    needs_mask = (n_row_tiles * tr * _LANES) != N

    kernel = functools.partial(_scst_stats_kernel,
                               n_valid=N, tr=tr, needs_mask=needs_mask)

    bytes_in = x3.size * x3.dtype.itemsize + t3.size * t3.dtype.itemsize
    cost = pl.CostEstimate(
        flops=20 * B * N,                 # products, squares, focal polynomial
        transcendentals=2 * B * N,        # two logs per element
        bytes_accessed=bytes_in + B * 3 * _LANES * 4,
    )

    stats = pl.pallas_call(
        kernel,
        out_shape=jax.ShapeDtypeStruct((B, 3, _LANES), jnp.float32),
        grid_spec=pltpu.PrefetchScalarGridSpec(
            num_scalar_prefetch=0,
            grid=(B, n_row_tiles),
            in_specs=[
                pl.BlockSpec((1, tr, _LANES), lambda b, k: (b, k, 0)),
                pl.BlockSpec((1, tr, _LANES), lambda b, k: (b, k, 0)),
            ],
            out_specs=pl.BlockSpec((1, 3, _LANES), lambda b, k: (b, 0, 0)),
            scratch_shapes=[pltpu.VMEM((3, 1, _LANES), jnp.float32)],
        ),
        compiler_params=pltpu.CompilerParams(
            dimension_semantics=("parallel", "arbitrary")),
        cost_estimate=cost,
    )(x3, t3)                                            # native dtypes, no boundary cast

    totals = jnp.sum(stats, axis=-1)                     # (B, 3): tiny epilogue reduce
    return totals[:, 0], totals[:, 1], totals[:, 2]


def scst_forward(inputs, target, baseline_score, phase, metric="dice"):
    """Mirrors SCST.forward from src/losses.py."""
    B = inputs.shape[0]
    N = int(math.prod(inputs.shape[1:]))

    intersect, union, focal_sum = _scst_stats(inputs, target)

    if phase == "train":
        if metric == "dice":
            # dice_scst: per-sample dice coefficient score (reward signal).
            score = (2.0 * intersect + _SMOOTH) / (union + _SMOOTH)
            advantage = score - baseline_score
        else:
            # TODO(synk): hausdorff distance has no clean Pallas equivalent here.
            raise NotImplementedError("hausdorff metric not implemented")
        focal_loss = jnp.sum(focal_sum) / (B * N)        # FocalLoss().forward(...).mean()
        loss = -jnp.mean(advantage) * focal_loss         # matches reference formulation
        return jnp.mean(loss)                            # scalar .mean() is identity
    # eval path: DiceLoss
    dice = 1.0 - (2.0 * intersect + _SMOOTH) / (union + _SMOOTH)
    return jnp.mean(dice)


if __name__ == "__main__":
    key = jax.random.PRNGKey(0)
    k1, k2, k3 = jax.random.split(key, 3)

    B, C, H, W = 2, 4, 16, 16
    x = jax.nn.sigmoid(jax.random.normal(k1, (B, C, H, W), jnp.float32))
    t = (jax.random.uniform(k2, (B, C, H, W)) > 0.5).astype(jnp.float32)
    baseline = jax.random.uniform(k3, (B,), jnp.float32)

    train_loss = jax.block_until_ready(scst_forward(x, t, baseline, "train"))
    eval_loss = jax.block_until_ready(scst_forward(x, t, baseline, "eval"))

    # Pure-JAX reference (same math) for a sanity check.
    def _ref(phase):
        xf = x.reshape(B, -1)
        tf = t.reshape(B, -1)
        inter = jnp.sum(xf * tf, axis=1)
        union = jnp.sum(xf * xf, axis=1) + jnp.sum(tf * tf, axis=1)
        if phase == "train":
            score = (2.0 * inter + _SMOOTH) / (union + _SMOOTH)
            adv = score - baseline
            xc = jnp.clip(xf, _EPS, 1.0 - _EPS)
            fl = -(tf * (1.0 - xc) ** 2 * jnp.log(xc)
                   + (1.0 - tf) * xc ** 2 * jnp.log(1.0 - xc))
            return -jnp.mean(adv) * jnp.mean(fl)
        return jnp.mean(1.0 - (2.0 * inter + _SMOOTH) / (union + _SMOOTH))

    assert train_loss.shape == () and eval_loss.shape == ()
    assert jnp.isfinite(train_loss) and jnp.isfinite(eval_loss)
    assert jnp.allclose(train_loss, _ref("train"), rtol=1e-4, atol=1e-5)
    assert jnp.allclose(eval_loss, _ref("eval"), rtol=1e-4, atol=1e-5)
    print("KERNEL_OK")
</pallas_src>

<mosaic_0001>
module attributes {stable_mosaic.version = 11 : i64} {
  func.func @_scst_stats_kernel(%arg0: i32, %arg1: i32, %arg2: memref<1x8x128xf32, #tpu.memory_space<vmem>>, %arg3: memref<1x8x128xf32, #tpu.memory_space<vmem>>, %arg4: memref<1x3x128xf32, #tpu.memory_space<vmem>>, %arg5: memref<3x1x128xf32, #tpu.memory_space<vmem>>) attributes {dimension_semantics = [#tpu.dimension_semantics<parallel>, #tpu.dimension_semantics<arbitrary>], iteration_bounds = array<i64: 2, 1>, scalar_prefetch = 0 : i64, scratch_operands = 1 : i64, tpu.core_type = #tpu.core_type<tc>, window_params = [{transform_indices = @transform_0, window_bounds = array<i64: 1, 8, 128>}, {transform_indices = @transform_1, window_bounds = array<i64: 1, 8, 128>}, {transform_indices = @transform_2, window_bounds = array<i64: 1, 3, 128>}]} {
    %c0_i32 = arith.constant 0 : i32
    %0 = arith.cmpi eq, %arg1, %c0_i32 : i32
    %1 = arith.extui %0 : i1 to i32
    %c0_i32_0 = arith.constant 0 : i32
    %2 = arith.cmpi ne, %1, %c0_i32_0 : i32
    scf.if %2 {
      %cst_31 = arith.constant 0.000000e+00 : f32
      %57 = vector.broadcast %cst_31 : f32 to vector<3x1x128xf32>
      %c0_32 = arith.constant 0 : index
      %c0_33 = arith.constant 0 : index
      %c0_34 = arith.constant 0 : index
      %58 = vector.load %arg5[%c0_32, %c0_33, %c0_34] : memref<3x1x128xf32, #tpu.memory_space<vmem>>, vector<3x1x128xf32>
      tpu.vector_store %arg5[%c0_32, %c0_33, %c0_34], %57 {strides = array<i32>} : memref<3x1x128xf32, #tpu.memory_space<vmem>>, vector<3x1x128xf32>,
    } else {
    }
    %c0 = arith.constant 0 : index
    %c0_1 = arith.constant 0 : index
    %c0_2 = arith.constant 0 : index
    %3 = vector.load %arg2[%c0, %c0_1, %c0_2] : memref<1x8x128xf32, #tpu.memory_space<vmem>>, vector<1x8x128xf32>
    %4 = vector.shape_cast %3 : vector<1x8x128xf32> to vector<8x128xf32>
    %c0_3 = arith.constant 0 : index
    %c0_4 = arith.constant 0 : index
    %c0_5 = arith.constant 0 : index
    %5 = vector.load %arg3[%c0_3, %c0_4, %c0_5] : memref<1x8x128xf32, #tpu.memory_space<vmem>>, vector<1x8x128xf32>
    %6 = vector.shape_cast %5 : vector<1x8x128xf32> to vector<8x128xf32>
    %7 = arith.mulf %4, %6 : vector<8x128xf32>
    %8 = arith.mulf %4, %4 : vector<8x128xf32>
    %9 = arith.mulf %6, %6 : vector<8x128xf32>
    %10 = arith.addf %8, %9 : vector<8x128xf32>
    %cst = arith.constant 1.000000e-03 : f32
    %cst_6 = arith.constant 9.990000e-01 : f32
    %11 = vector.broadcast %cst : f32 to vector<8x128xf32>
    %12 = arith.maximumf %11, %4 : vector<8x128xf32>
    %13 = vector.broadcast %cst_6 : f32 to vector<8x128xf32>
    %14 = arith.minimumf %13, %12 : vector<8x128xf32>
    %cst_7 = arith.constant 1.000000e+00 : f32
    %15 = vector.broadcast %cst_7 : f32 to vector<8x128xf32>
    %16 = arith.subf %15, %14 : vector<8x128xf32>
    %17 = arith.mulf %16, %16 : vector<8x128xf32>
    %18 = arith.mulf %6, %17 : vector<8x128xf32>
    %19 = math.log %14 : vector<8x128xf32>
    %20 = arith.mulf %18, %19 : vector<8x128xf32>
    %cst_8 = arith.constant 1.000000e+00 : f32
    %21 = vector.broadcast %cst_8 : f32 to vector<8x128xf32>
    %22 = arith.subf %21, %6 : vector<8x128xf32>
    %23 = arith.mulf %14, %14 : vector<8x128xf32>
    %24 = arith.mulf %22, %23 : vector<8x128xf32>
    %25 = math.log %16 : vector<8x128xf32>
    %26 = arith.mulf %24, %25 : vector<8x128xf32>
    %27 = arith.addf %20, %26 : vector<8x128xf32>
    %cst_9 = arith.constant 0.000000e+00 : f32
    %28 = vector.broadcast %cst_9 : f32 to vector<8x128xf32>
    %29 = arith.subf %28, %27 : vector<8x128xf32>
    %c0_10 = arith.constant 0 : index
    %c0_11 = arith.constant 0 : index
    %c0_12 = arith.constant 0 : index
    %30 = vector.load %arg5[%c0_10, %c0_11, %c0_12] : memref<3x1x128xf32, #tpu.memory_space<vmem>>, vector<1x1x128xf32>
    %31 = vector.shape_cast %30 : vector<1x1x128xf32> to vector<1x128xf32>
    %cst_13 = arith.constant dense<0.000000e+00> : vector<128xf32>
    %32 = vector.multi_reduction <add>, %7, %cst_13 [0] : vector<8x128xf32> to vector<128xf32>
    %33 = vector.shape_cast %32 : vector<128xf32> to vector<1x128xf32>
    %34 = arith.addf %31, %33 : vector<1x128xf32>
    %c0_14 = arith.constant 0 : index
    %c0_15 = arith.constant 0 : index
    %c0_16 = arith.constant 0 : index
    %35 = vector.load %arg5[%c0_14, %c0_15, %c0_16] : memref<3x1x128xf32, #tpu.memory_space<vmem>>, vector<1x1x128xf32>
    %36 = vector.shape_cast %35 : vector<1x1x128xf32> to vector<1x128xf32>
    %37 = vector.shape_cast %34 : vector<1x128xf32> to vector<1x1x128xf32>
    tpu.vector_store %arg5[%c0_14, %c0_15, %c0_16], %37 {strides = array<i32>} : memref<3x1x128xf32, #tpu.memory_space<vmem>>, vector<1x1x128xf32>,
    %c1 = arith.constant 1 : index
    %c0_17 = arith.constant 0 : index
    %c0_18 = arith.constant 0 : index
    %38 = vector.load %arg5[%c1, %c0_17, %c0_18] : memref<3x1x128xf32, #tpu.memory_space<vmem>>, vector<1x1x128xf32>
    %39 = vector.shape_cast %38 : vector<1x1x128xf32> to vector<1x128xf32>
    %cst_19 = arith.constant dense<0.000000e+00> : vector<128xf32>
    %40 = vector.multi_reduction <add>, %10, %cst_19 [0] : vector<8x128xf32> to vector<128xf32>
    %41 = vector.shape_cast %40 : vector<128xf32> to vector<1x128xf32>
    %42 = arith.addf %39, %41 : vector<1x128xf32>
    %c1_20 = arith.constant 1 : index
    %c0_21 = arith.constant 0 : index
    %c0_22 = arith.constant 0 : index
    %43 = vector.load %arg5[%c1_20, %c0_21, %c0_22] : memref<3x1x128xf32, #tpu.memory_space<vmem>>, vector<1x1x128xf32>
    %44 = vector.shape_cast %43 : vector<1x1x128xf32> to vector<1x128xf32>
    %45 = vector.shape_cast %42 : vector<1x128xf32> to vector<1x1x128xf32>
    tpu.vector_store %arg5[%c1_20, %c0_21, %c0_22], %45 {strides = array<i32>} : memref<3x1x128xf32, #tpu.memory_space<vmem>>, vector<1x1x128xf32>,
    %c2 = arith.constant 2 : index
    %c0_23 = arith.constant 0 : index
    %c0_24 = arith.constant 0 : index
    %46 = vector.load %arg5[%c2, %c0_23, %c0_24] : memref<3x1x128xf32, #tpu.memory_space<vmem>>, vector<1x1x128xf32>
    %47 = vector.shape_cast %46 : vector<1x1x128xf32> to vector<1x128xf32>
    %cst_25 = arith.constant dense<0.000000e+00> : vector<128xf32>
    %48 = vector.multi_reduction <add>, %29, %cst_25 [0] : vector<8x128xf32> to vector<128xf32>
    %49 = vector.shape_cast %48 : vector<128xf32> to vector<1x128xf32>
    %50 = arith.addf %47, %49 : vector<1x128xf32>
    %c2_26 = arith.constant 2 : index
    %c0_27 = arith.constant 0 : index
    %c0_28 = arith.constant 0 : index
    %51 = vector.load %arg5[%c2_26, %c0_27, %c0_28] : memref<3x1x128xf32, #tpu.memory_space<vmem>>, vector<1x1x128xf32>
    %52 = vector.shape_cast %51 : vector<1x1x128xf32> to vector<1x128xf32>
    %53 = vector.shape_cast %50 : vector<1x128xf32> to vector<1x1x128xf32>
    tpu.vector_store %arg5[%c2_26, %c0_27, %c0_28], %53 {strides = array<i32>} : memref<3x1x128xf32, #tpu.memory_space<vmem>>, vector<1x1x128xf32>,
    %c0_i32_29 = arith.constant 0 : i32
    %54 = arith.cmpi eq, %arg1, %c0_i32_29 : i32
    %55 = arith.extui %54 : i1 to i32
    %c0_i32_30 = arith.constant 0 : i32
    %56 = arith.cmpi ne, %55, %c0_i32_30 : i32
    scf.if %56 {
      %c0_31 = arith.constant 0 : index
      %c0_32 = arith.constant 0 : index
      %c0_33 = arith.constant 0 : index
      %57 = vector.load %arg5[%c0_31, %c0_32, %c0_33] : memref<3x1x128xf32, #tpu.memory_space<vmem>>, vector<1x1x128xf32>
      %58 = vector.shape_cast %57 : vector<1x1x128xf32> to vector<1x128xf32>
      %c0_34 = arith.constant 0 : index
      %c0_35 = arith.constant 0 : index
      %c0_36 = arith.constant 0 : index
      %59 = vector.load %arg4[%c0_34, %c0_35, %c0_36] : memref<1x3x128xf32, #tpu.memory_space<vmem>>, vector<1x1x128xf32>
      %60 = vector.shape_cast %59 : vector<1x1x128xf32> to vector<1x128xf32>
      %61 = vector.shape_cast %58 : vector<1x128xf32> to vector<1x1x128xf32>
      tpu.vector_store %arg4[%c0_34, %c0_35, %c0_36], %61 {strides = array<i32>} : memref<1x3x128xf32, #tpu.memory_space<vmem>>, vector<1x1x128xf32>,
      %c1_37 = arith.constant 1 : index
      %c0_38 = arith.constant 0 : index
      %c0_39 = arith.constant 0 : index
      %62 = vector.load %arg5[%c1_37, %c0_38, %c0_39] : memref<3x1x128xf32, #tpu.memory_space<vmem>>, vector<1x1x128xf32>
      %63 = vector.shape_cast %62 : vector<1x1x128xf32> to vector<1x128xf32>
      %c0_40 = arith.constant 0 : index
      %c1_41 = arith.constant 1 : index
      %c0_42 = arith.constant 0 : index
      %64 = vector.load %arg4[%c0_40, %c1_41, %c0_42] : memref<1x3x128xf32, #tpu.memory_space<vmem>>, vector<1x1x128xf32>
      %65 = vector.shape_cast %64 : vector<1x1x128xf32> to vector<1x128xf32>
      %66 = vector.shape_cast %63 : vector<1x128xf32> to vector<1x1x128xf32>
      tpu.vector_store %arg4[%c0_40, %c1_41, %c0_42], %66 {strides = array<i32>} : memref<1x3x128xf32, #tpu.memory_space<vmem>>, vector<1x1x128xf32>,
      %c2_43 = arith.constant 2 : index
      %c0_44 = arith.constant 0 : index
      %c0_45 = arith.constant 0 : index
      %67 = vector.load %arg5[%c2_43, %c0_44, %c0_45] : memref<3x1x128xf32, #tpu.memory_space<vmem>>, vector<1x1x128xf32>
      %68 = vector.shape_cast %67 : vector<1x1x128xf32> to vector<1x128xf32>
      %c0_46 = arith.constant 0 : index
      %c2_47 = arith.constant 2 : index
      %c0_48 = arith.constant 0 : index
      %69 = vector.load %arg4[%c0_46, %c2_47, %c0_48] : memref<1x3x128xf32, #tpu.memory_space<vmem>>, vector<1x1x128xf32>
      %70 = vector.shape_cast %69 : vector<1x1x128xf32> to vector<1x128xf32>
      %71 = vector.shape_cast %68 : vector<1x128xf32> to vector<1x1x128xf32>
      tpu.vector_store %arg4[%c0_46, %c2_47, %c0_48], %71 {strides = array<i32>} : memref<1x3x128xf32, #tpu.memory_space<vmem>>, vector<1x1x128xf32>,
    } else {
    }
    return
  }
  func.func @transform_0(%arg0: i32, %arg1: i32) -> (i32, i32, i32) {
    %c0_i32 = arith.constant 0 : i32
    %c0_i32_0 = arith.constant 0 : i32
    return %arg0, %arg1, %c0_i32 : i32, i32, i32
  }
  func.func @transform_1(%arg0: i32, %arg1: i32) -> (i32, i32, i32) {
    %c0_i32 = arith.constant 0 : i32
    %c0_i32_0 = arith.constant 0 : i32
    return %arg0, %arg1, %c0_i32 : i32, i32, i32
  }
  func.func @transform_2(%arg0: i32, %arg1: i32) -> (i32, i32, i32) {
    %c0_i32 = arith.constant 0 : i32
    %c0_i32_0 = arith.constant 0 : i32
    %c0_i32_1 = arith.constant 0 : i32
    return %arg0, %c0_i32, %c0_i32_0 : i32, i32, i32
  }
}

</mosaic_0001>

<llo_original>
// kernel: tpu_custom_call.1
$region0: #{tpu_custom_call.1}
  #allocation0 [shape = 'u32[]', space=smem, size = 0x4, offset = 0x4, fixed_abs, tag = 'smem constant byte address 0x4 - core index']
  #allocation1 [shape = 'u32[144,128]{1,0:T(1,128)}', space=vmem, size = 0x12000, scoped, tag = 'internal scratch']
  #allocation2 [shape = 'f32[3,1,128]{2,1,0:T(1,128)}', space=vmem, size = 0x600, scoped, tag = 'scratch operand']
  %s0 = inlined_call_operand.hbm [shape: f32[2,8,128], index: 0, kind: input, shape index: {}]
  %s1 = inlined_call_operand.hbm [shape: f32[2,8,128], index: 1, kind: input, shape index: {}]
  %s2 = inlined_call_operand.vmem [shape: f32[2,3,128], index: 2, kind: output, shape index: {}]
  %s3 = sld [smem:[#allocation0]]
  $region57: #{tpu_custom_call.1} parent=0
    _
  %s5 = ssub.s32 1, %s3
  %s6 = scalar_select 0, %s5, %s3
  $region1: #{tpu_custom_call.1} parent=0
    #allocation3 [shape = 'u8[8192]{0}', space=vmem, size = 0x2000, scoped, tag = 'input window, operand 0']
    #allocation4 [shape = 's32[2]{0}', space=sflag, size = 0x8, scoped, tag = 'scoped memory for tpu_custom_call.1']
    #allocation5 [shape = 'u8[8192]{0}', space=vmem, size = 0x2000, scoped, tag = 'input window, operand 1']
    #allocation6 [shape = 's32[2]{0}', space=sflag, size = 0x8, scoped, tag = 'scoped memory for tpu_custom_call.1']
    %7 = vsyncpa [#allocation4], 0
    %s8 = scalar_lea.sflag [#allocation4], 1
    %9 = vsyncpa %s8, 0
    %10 = vsyncpa [#allocation6], 0
    %s11 = scalar_lea.sflag [#allocation6], 1
    %12 = vsyncpa %s11, 0
    loop: start=0, step=1, limit=4
    $region2: #{tpu_custom_call.1} parent=1 // loop_pre_header
      _
    $region3: #{tpu_custom_call.1} parent=1 // loop_header
      %s14 = sphi 0, %s18
      %p15 = scmp.ge.s32.totalorder %s14, 4
      %s21 = sphi 0, %s33
      %s22 = sphi 0, %s29
      %s23 = sphi 0, %s21
      %s24 = sphi 0, %s22
      %s25 = sphi 0, %s23
      %s26 = sphi 0, %s24
      %s38 = sphi 0, %s40
      %s41 = sphi 0, %s38
      %s42 = sphi 0, %s41
      %s58 = sphi 0, %s42
      %s66 = sphi 0, %s68
      %s69 = sphi 0, %s66
      %s70 = sphi 0, %s69
      %s86 = sphi 0, %s70
      %s92 = sphi 0, %s94
      %s95 = sphi 0, %s92
      %s96 = sphi 0, %s95
      %s112 = sphi 0, %s96
    $region4: #{tpu_custom_call.1} parent=1 // loop_header_branch
      %17 = sbr.rel (%p15) target = $region8
    $region5: #{tpu_custom_call.1} parent=1 // loop_body
      %s19 = ssub.s32 %s14, 1
      %s20 = ssub.s32 %s14, 2
      %s27 = sadd.s32 1, %s22
      %p28 = scmp.ge.s32.totalorder %s27, 1
      %s29 = scalar_select %p28, 0, %s27
      %s30 = sadd.s32 1, %s21
      %s31 = scalar_select %p28, %s30, %s21
      %p32 = scmp.ge.s32.totalorder %s31, 2
      %s33 = scalar_select %p32, 0, %s31
      %s34 = ssub.s32 %s21, %s33
      %s35 = ssub.s32 %s22, %s29
      %s36 = sor.u32 %s34, %s35
      %p37 = scmp.eq.s32.totalorder %s36, 0
      %s39 = sadd.s32 %s38, 1
      %s40 = scalar_select %p37, %s38, %s39
      %p43 = pneg %p37
      %p44 = scmp.eq.s32.totalorder %s14, 1
      %p45 = por %p43, %p44
      %p46 = scmp.ne.s32.totalorder %s38, %s41
      %p47 = scmp.eq.s32.totalorder %s14, 0
      %p48 = por %p46, %p47
      %p49 = scmp.ne.s32.totalorder %s38, %s41
      %p50 = scmp.eq.s32.totalorder %s19, 1
      %p51 = por %p49, %p50
      %p52 = scmp.ne.s32.totalorder %s41, %s42
      %p53 = scmp.eq.s32.totalorder %s19, 0
      %p54 = por %p52, %p53
      %p55 = scmp.ne.s32.totalorder %s41, %s42
      %p56 = scmp.eq.s32.totalorder %s20, 1
      %p57 = por %p55, %p56
      %p59 = scmp.ne.s32.totalorder %s42, %s58
      %p60 = scmp.eq.s32.totalorder %s20, 0
      %p61 = por %p59, %p60
      %s62 = ssub.s32 %s21, %s33
      %s63 = ssub.s32 %s22, %s29
      %s64 = sor.u32 %s62, %s63
      %p65 = scmp.eq.s32.totalorder %s64, 0
      %s67 = sadd.s32 %s66, 1
      %s68 = scalar_select %p65, %s66, %s67
      %p71 = pneg %p65
      %p72 = scmp.eq.s32.totalorder %s14, 1
      %p73 = por %p71, %p72
      %p74 = scmp.ne.s32.totalorder %s66, %s69
      %p75 = scmp.eq.s32.totalorder %s14, 0
      %p76 = por %p74, %p75
      %p77 = scmp.ne.s32.totalorder %s66, %s69
      %p78 = scmp.eq.s32.totalorder %s19, 1
      %p79 = por %p77, %p78
      %p80 = scmp.ne.s32.totalorder %s69, %s70
      %p81 = scmp.eq.s32.totalorder %s19, 0
      %p82 = por %p80, %p81
      %p83 = scmp.ne.s32.totalorder %s69, %s70
      %p84 = scmp.eq.s32.totalorder %s20, 1
      %p85 = por %p83, %p84
      %p87 = scmp.ne.s32.totalorder %s70, %s86
      %p88 = scmp.eq.s32.totalorder %s20, 0
      %p89 = por %p87, %p88
      %s90 = ssub.s32 %s21, %s33
      %p91 = scmp.eq.s32.totalorder %s90, 0
      %s93 = sadd.s32 %s92, 1
      %s94 = scalar_select %p91, %s92, %s93
      %p97 = pneg %p91
      %p98 = scmp.eq.s32.totalorder %s14, 1
      %p99 = por %p97, %p98
      %p100 = scmp.ne.s32.totalorder %s92, %s95
      %p101 = scmp.eq.s32.totalorder %s14, 0
      %p102 = por %p100, %p101
      %p103 = scmp.ne.s32.totalorder %s92, %s95
      %p104 = scmp.eq.s32.totalorder %s19, 1
      %p105 = por %p103, %p104
      %p106 = scmp.ne.s32.totalorder %s95, %s96
      %p107 = scmp.eq.s32.totalorder %s19, 0
      %p108 = por %p106, %p107
      %p109 = scmp.ne.s32.totalorder %s95, %s96
      %p110 = scmp.eq.s32.totalorder %s20, 1
      %p111 = por %p109, %p110
      %p113 = scmp.ne.s32.totalorder %s96, %s112
      %p114 = scmp.eq.s32.totalorder %s20, 0
      %p115 = por %p113, %p114
      %p116 = scmp.le.s32.totalorder 1, %s14
      %p117 = scmp.lt.s32.totalorder %s14, 3
      %p118 = pnand %p116, %p117
      %p119 = pneg %p118
      // Predicated region
      $region9: #{tpu_custom_call.1} parent=5 // pred_check
        _
      $region10: #{tpu_custom_call.1} parent=5 // pred_check_branch
        %121 = sbr.rel (%p118) target = $region12
      $region11: #{tpu_custom_call.1} parent=5 // pred_region
        %s122 = ssub.s32 %s14, 1
      $region12: #{tpu_custom_call.1} parent=5 // pred_fallthru
        _
      %p123 = scmp.lt.s32.totalorder %s14, 2
      // Predicated region
      $region13: #{tpu_custom_call.1} parent=5 // pred_check
        %p124 = pneg %p123
      $region14: #{tpu_custom_call.1} parent=5 // pred_check_branch
        %126 = sbr.rel (%p124) target = $region16
      $region15: #{tpu_custom_call.1} parent=5 // pred_region
        // Predicated region
        $region17: #{tpu_custom_call.1} parent=15 // pred_check
          %p127 = pneg %p48
        $region18: #{tpu_custom_call.1} parent=15 // pred_check_branch
          %129 = sbr.rel (%p127) target = $region20
        $region19: #{tpu_custom_call.1} parent=15 // pred_region
          %s130 = sand.u32 %s38, 1
          %s131 = scalar_lea.sflag [#allocation4], %s130
          %s132 = sand.u32 %s38, 1
          %s133 = smul.addr %s132, 8
          %s134 = scalar_lea.vmem [#allocation3], %s133
          %s136 = ssub.s32 128, 128
          %137 = vsyncadd %s131, %s136
          %s138 = sadd.s32 %s22, %s21
          %s139 = smul.addr %s138, 128
          %s140 = scalar_lea.hbm %s0, %s139
          %s142 = sshll.u32 %s134, 4
          %s143 = int_to_ptr.vmem [resolvable:$true] %s142
          %145 = dma.hbm_to_vmem [thread:$0]  %s140, 128, %s143, %s131
        $region20: #{tpu_custom_call.1} parent=15 // pred_fallthru
          _
        // Predicated region
        $region21: #{tpu_custom_call.1} parent=15 // pred_check
          %p146 = pneg %p76
        $region22: #{tpu_custom_call.1} parent=15 // pred_check_branch
          %148 = sbr.rel (%p146) target = $region24
        $region23: #{tpu_custom_call.1} parent=15 // pred_region
          %s149 = sand.u32 %s66, 1
          %s150 = scalar_lea.sflag [#allocation6], %s149
          %s151 = sand.u32 %s66, 1
          %s152 = smul.addr %s151, 8
          %s153 = scalar_lea.vmem [#allocation5], %s152
          %s155 = ssub.s32 128, 128
          %156 = vsyncadd %s150, %s155
          %s157 = sadd.s32 %s22, %s21
          %s158 = smul.addr %s157, 128
          %s159 = scalar_lea.hbm %s1, %s158
          %s161 = sshll.u32 %s153, 4
          %s162 = int_to_ptr.vmem [resolvable:$true] %s161
          %164 = dma.hbm_to_vmem [thread:$0]  %s159, 128, %s162, %s150
        $region24: #{tpu_custom_call.1} parent=15 // pred_fallthru
          _
      $region16: #{tpu_custom_call.1} parent=5 // pred_fallthru
        _
      %p165 = scmp.le.s32.totalorder 1, %s14
      %p166 = scmp.lt.s32.totalorder %s14, 3
      %p167 = pnand %p165, %p166
      %p168 = pneg %p167
      // Predicated region
      $region25: #{tpu_custom_call.1} parent=5 // pred_check
        _
      $region26: #{tpu_custom_call.1} parent=5 // pred_check_branch
        %170 = sbr.rel (%p167) target = $region28
      $region27: #{tpu_custom_call.1} parent=5 // pred_region
        %s171 = ssub.s32 %s14, 1
        %s172 = sand.u32 %s41, 1
        %s173 = scalar_lea.sflag [#allocation4], %s172
        %s174 = sand.u32 %s41, 1
        %s175 = smul.addr %s174, 8
        %s176 = scalar_lea.vmem [#allocation3], %s175
        // Predicated region
        $region29: #{tpu_custom_call.1} parent=27 // pred_check
          %p177 = pneg %p54
        $region30: #{tpu_custom_call.1} parent=27 // pred_check_branch
          %179 = sbr.rel (%p177) target = $region32
        $region31: #{tpu_custom_call.1} parent=27 // pred_region
          %180 = dma.done %s173, 128
        $region32: #{tpu_custom_call.1} parent=27 // pred_fallthru
          _
        %s181 = sand.u32 %s69, 1
        %s182 = scalar_lea.sflag [#allocation6], %s181
        %s183 = sand.u32 %s69, 1
        %s184 = smul.addr %s183, 8
        %s185 = scalar_lea.vmem [#allocation5], %s184
        // Predicated region
        $region33: #{tpu_custom_call.1} parent=27 // pred_check
          %p186 = pneg %p82
        $region34: #{tpu_custom_call.1} parent=27 // pred_check_branch
          %188 = sbr.rel (%p186) target = $region36
        $region35: #{tpu_custom_call.1} parent=27 // pred_region
          %189 = dma.done %s182, 128
        $region36: #{tpu_custom_call.1} parent=27 // pred_fallthru
          _
        %s190 = sand.u32 %s41, 1
        %s191 = scalar_lea.sflag [#allocation4], %s190
        %s192 = sand.u32 %s41, 1
        %s193 = smul.addr %s192, 8
        %s194 = scalar_lea.vmem [#allocation3], %s193
        %p195 = pneg %p54
        %p196 = pneg %p51
        %s197 = sand.u32 %s69, 1
        %s198 = scalar_lea.sflag [#allocation6], %s197
        %s199 = sand.u32 %s69, 1
        %s200 = smul.addr %s199, 8
        %s201 = scalar_lea.vmem [#allocation5], %s200
        %p202 = pneg %p82
        %p203 = pneg %p79
        %p204 = pneg %p108
        %p205 = pneg %p105
        %p206 = scmp.lt.s32.totalorder %s23, 1
        %s207 = scalar_select %p206, %s23, 1
        %s208 = smul.addr %s207, 4
        %s209 = scalar_lea.vmem %s2, %s208
        %p210 = scmp.lt.s32.totalorder %s23, 1
        %s211 = scalar_select %p210, %s23, 1
        %s212 = smul.addr %s211, 4
        %s213 = scalar_lea.vmem %s2, %s212
        %p214 = scmp.eq.s32.totalorder %s24, 0
        // Predicated region
        $region37: #{tpu_custom_call.1} parent=27 // pred_check
          %p215 = pneg %p214
        $region38: #{tpu_custom_call.1} parent=27 // pred_check_branch
          %217 = sbr.rel (%p215) target = $region40
        $region39: #{tpu_custom_call.1} parent=27 // pred_region
          %218 = vst [vmem:[#allocation2] sm:$0x1] 0.0
          %219 = vst [vmem:[#allocation2 + $0x1] sm:$0x1] 0.0
          %220 = vst [vmem:[#allocation2 + $0x2] sm:$0x1] 0.0
        $region40: #{tpu_custom_call.1} parent=27 // pred_fallthru
          _
        %v221 = vld [vmem:[%s176] sm:$0xff]
        %v222 = vld [vmem:[%s185] sm:$0xff]
        %v223 = vmul.f32 %v221, %v222
        %v224 = vmul.f32 %v221, %v221
        %v225 = vmul.f32 %v222, %v222
        %v226 = vadd.f32 %v224, %v225
        %v227 = vmax.f32 %v221, 0.001
        %v228 = vmin.f32 %v227, 0.999
        %v229 = vsub.f32 1.0, %v228
        %v230 = vmul.f32 %v229, %v229
        %v231 = vmul.f32 %v222, %v230
        %v232 = vlog2.pop %v228
        %v233 = vmul.f32 %v232, 0.6931472
        %v234 = vmul.f32 %v231, %v233
        %v235 = vsub.f32 1.0, %v222
        %v236 = vmul.f32 %v228, %v228
        %v237 = vmul.f32 %v235, %v236
        %v238 = vlog2.pop %v229
        %v239 = vmul.f32 %v238, 0.6931472
        %v240 = vmul.f32 %v237, %v239
        %v241 = vadd.f32 %v234, %v240
        %v242 = vsub.f32 0.0, %v241
        %v243 = vld [vmem:[#allocation2] sm:$0x1]
        %v244 = vrot.slane %v223, 4
        %v245 = vadd.f32 %v223, %v244
        %v246 = vrot.slane %v245, 2
        %v247 = vadd.f32 %v245, %v246
        %v248 = vrot.slane %v247, 1
        %v249 = vadd.f32 %v247, %v248
        %v250 = vadd.f32 %v243, %v249
        %251 = vst [vmem:[#allocation2] sm:$0x1] %v250
        %s252 = scalar_lea.vmem [#allocation2], 1
        %v253 = vld [vmem:[%s252] sm:$0x1]
        %v254 = vrot.slane %v226, 4
        %v255 = vadd.f32 %v226, %v254
        %v256 = vrot.slane %v255, 2
        %v257 = vadd.f32 %v255, %v256
        %v258 = vrot.slane %v257, 1
        %v259 = vadd.f32 %v257, %v258
        %v260 = vadd.f32 %v253, %v259
        %261 = vst [vmem:[%s252] sm:$0x1] %v260
        %s262 = scalar_lea.vmem [#allocation2], 2
        %v263 = vld [vmem:[%s262] sm:$0x1]
        %v264 = vrot.slane %v242, 4
        %v265 = vadd.f32 %v242, %v264
        %v266 = vrot.slane %v265, 2
        %v267 = vadd.f32 %v265, %v266
        %v268 = vrot.slane %v267, 1
        %v269 = vadd.f32 %v267, %v268
        %v270 = vadd.f32 %v263, %v269
        %271 = vst [vmem:[%s262] sm:$0x1] %v270
        // Predicated region
        $region41: #{tpu_custom_call.1} parent=27 // pred_check
          %p272 = pneg %p214
        $region42: #{tpu_custom_call.1} parent=27 // pred_check_branch
          %274 = sbr.rel (%p272) target = $region44
        $region43: #{tpu_custom_call.1} parent=27 // pred_region
          %v275 = vld [vmem:[#allocation2] sm:$0x1]
          %276 = vst [vmem:[%s213] sm:$0x1] %v275
          %v277 = vld [vmem:[%s252] sm:$0x1]
          %278 = vst [vmem:[%s213 + $0x1] sm:$0x1] %v277
          %v279 = vld [vmem:[%s262] sm:$0x1]
          %280 = vst [vmem:[%s213 + $0x2] sm:$0x1] %v279
        $region44: #{tpu_custom_call.1} parent=27 // pred_fallthru
          _
        %p281 = scmp.lt.s32.totalorder %s23, 1
        %s282 = scalar_select %p281, %s23, 1
        %s283 = smul.addr %s282, 4
        %s284 = scalar_lea.vmem %s2, %s283
        // Predicated region
        $region45: #{tpu_custom_call.1} parent=27 // pred_check
          %p285 = pneg %p105
        $region46: #{tpu_custom_call.1} parent=27 // pred_check_branch
          %287 = sbr.rel (%p285) target = $region48
        $region47: #{tpu_custom_call.1} parent=27 // pred_region
          _
        $region48: #{tpu_custom_call.1} parent=27 // pred_fallthru
          _
      $region28: #{tpu_custom_call.1} parent=5 // pred_fallthru
        _
      %p288 = scmp.le.s32.totalorder 2, %s14
      // Predicated region
      $region49: #{tpu_custom_call.1} parent=5 // pred_check
        %p289 = pneg %p288
      $region50: #{tpu_custom_call.1} parent=5 // pred_check_branch
        %291 = sbr.rel (%p289) target = $region52
      $region51: #{tpu_custom_call.1} parent=5 // pred_region
        %s292 = ssub.s32 %s14, 2
        // Predicated region
        $region53: #{tpu_custom_call.1} parent=51 // pred_check
          %p293 = pneg %p111
        $region54: #{tpu_custom_call.1} parent=51 // pred_check_branch
          %295 = sbr.rel (%p293) target = $region56
        $region55: #{tpu_custom_call.1} parent=51 // pred_region
          %p296 = scmp.lt.s32.totalorder %s25, 1
          %s297 = scalar_select %p296, %s25, 1
          %s298 = smul.addr %s297, 4
          %s299 = scalar_lea.vmem %s2, %s298
        $region56: #{tpu_custom_call.1} parent=51 // pred_fallthru
          _
      $region52: #{tpu_custom_call.1} parent=5 // pred_fallthru
        _
    $region6: #{tpu_custom_call.1} parent=1 // loop_footer
      %s18 = sadd.s32 1, %s14
    $region7: #{tpu_custom_call.1} parent=1 // loop_footer_branch
      %13 = sbr.rel target = $region3
    $region8: #{tpu_custom_call.1} parent=1 // loop_exit
      _
    %300 = vsyncpa [#allocation4], 1
    %s301 = scalar_lea.sflag [#allocation4], 1
    %302 = vsyncpa %s301, 1
    %303 = vsyncpa [#allocation6], 1
    %s304 = scalar_lea.sflag [#allocation6], 1
    %305 = vsyncpa %s304, 1

</llo_original>
